<compile_context>
chip_gen: v6e
topology: v6e:2x2x1
jax: 0.10.0
libtpu: 0.0.40
codegen_flags: <defaults>
</compile_context>

<pallas_src>
import numpy as np
import jax
import jax.numpy as jnp
from jax.experimental import pallas as pl
from jax.experimental.pallas import tpu as pltpu

_LANES = 128


def _round_up(x, m):
    return (x + m - 1) // m * m


# ----------------------------------------------------------------------------
# Pallas kernel: one lane-tile (block of agents) of pred_metrics
# ----------------------------------------------------------------------------
def _pred_metrics_kernel(pxy_ref, gxy_ref, met_ref, idx_ref):
    """Shapes (per tile; agents on lanes, time on sublanes):
      pxy_ref : (2, M, T, Bb)  preds, coord-split
      gxy_ref : (2, T, Bb)     ground truth, coord-split
      met_ref : (4, Bb)        per-agent partials [sum_T err0, err0_last,
                                                   sum_T err_sel, err_sel_last]
      idx_ref : (1, Bb)        best-mode index per agent (lane-dense)
    """
    _, M, T, Bb = pxy_ref.shape

    gx = gxy_ref[0]                                  # (T, Bb)
    gy = gxy_ref[1]

    # Streaming over modes: M is small & static -> fully unrolled, only a few
    # (T, Bb) slabs live at any point (no (M, T, Bb) intermediate, no spill).
    sq0 = None           # mode-0 squared error          (T, Bb)
    sel_sq = None        # best-mode squared error       (T, Bb)
    min_err_last = None  # running min of sqrt final err (1, Bb)
    best = None          # running argmin                (1, Bb) int32
    for m in range(M):
        dx = pxy_ref[0, m] - gx                      # (T, Bb)
        dy = pxy_ref[1, m] - gy
        sq_m = dx * dx + dy * dy                     # squared L2 error
        # sqrt the final-step row (1, Bb) so the argmin sees the exact same
        # f32 values as the numpy reference (sqrt rounding included).
        err_last_m = jnp.sqrt(sq_m[T - 1:T, :])
        if m == 0:
            sq0 = sq_m
            sel_sq = sq_m
            min_err_last = err_last_m
            best = jnp.zeros((1, Bb), dtype=jnp.int32)
        else:
            take = err_last_m < min_err_last         # strict < -> first-min ties
            min_err_last = jnp.where(take, err_last_m, min_err_last)
            best = jnp.where(take, jnp.int32(m), best)
            sel_sq = jnp.where(take, sq_m, sel_sq)   # (1,Bb) mask bcast to (T,Bb)
        # TODO(synk): NaN inputs keep best=0 here, whereas np.argmin would pick
        # the first NaN mode; acceptable for the PostProcess metrics path.

    # sqrt only on the two selected slabs (2*T*Bb EUP ops, not M*T*Bb).
    err0 = jnp.sqrt(sq0)                             # (T, Bb)
    err_sel = jnp.sqrt(sel_sq)                       # (T, Bb)

    # Per-agent (lane-dense) partials; T-reductions are cheap sublane adds.
    met_ref[0:1, :] = jnp.sum(err0, axis=0, keepdims=True)
    met_ref[1:2, :] = err0[T - 1:T, :]
    met_ref[2:3, :] = jnp.sum(err_sel, axis=0, keepdims=True)
    met_ref[3:4, :] = err_sel[T - 1:T, :]
    idx_ref[...] = best


@jax.jit
def _pred_metrics_device(preds, gt_preds):
    """preds: (B, M, T, 2) f32, gt_preds: (B, T, 2) f32 -> 4 scalars + idx."""
    B, M, T, _ = preds.shape

    # ---- lane-tile selection: multiple of 128; >=2 tiles when B is large
    # enough so both v7x TensorCores get work; cap tile lanes at 512 so the
    # pxy tile stays < ~1 MiB (comfortable under v5e's 16 MiB scoped VMEM).
    B128 = _round_up(B, _LANES)
    if B128 <= _LANES:
        block_b = _LANES
    else:
        half = _round_up((B128 + 1) // 2, _LANES)
        block_b = min(512, half)
    Bp = _round_up(B, block_b)
    nb = Bp // block_b

    # ---- single relayout pass: coord-split, agents last (lanes), time on
    # sublanes.  One transpose (+ pad, which XLA fuses into the same copy)
    # instead of multiple strided slices re-reading HBM.
    pxy = jnp.transpose(preds.astype(jnp.float32), (3, 1, 2, 0))   # (2, M, T, B)
    gxy = jnp.transpose(gt_preds.astype(jnp.float32), (2, 1, 0))   # (2, T, B)
    if Bp != B:  # zero-padded agents contribute 0 to every partial sum
        pxy = jnp.pad(pxy, ((0, 0), (0, 0), (0, 0), (0, Bp - B)))
        gxy = jnp.pad(gxy, ((0, 0), (0, 0), (0, Bp - B)))

    met, idx = pl.pallas_call(
        _pred_metrics_kernel,
        out_shape=(
            jax.ShapeDtypeStruct((4, Bp), jnp.float32),
            jax.ShapeDtypeStruct((1, Bp), jnp.int32),
        ),
        grid=(nb,),
        in_specs=[
            pl.BlockSpec((2, M, T, block_b), lambda i: (0, 0, 0, i)),
            pl.BlockSpec((2, T, block_b), lambda i: (0, 0, i)),
        ],
        out_specs=(
            pl.BlockSpec((4, block_b), lambda i: (0, i)),
            pl.BlockSpec((1, block_b), lambda i: (0, i)),
        ),
        compiler_params=pltpu.CompilerParams(
            # Lane-tiles are fully independent (per-agent partials) ->
            # 'parallel' lets v7x's two TensorCores split the agent range.
            dimension_semantics=("parallel",)),
    )(pxy, gxy)

    sums = jnp.sum(met, axis=1)                   # tiny cross-lane epilogue
    ade1 = sums[0] / (B * T)
    fde1 = sums[1] / B
    ade = sums[2] / (B * T)
    fde = sums[3] / B
    min_idcs = idx[0, :B]
    return ade1, fde1, ade, fde, min_idcs


def pred_metrics_pallas(preds, gt_preds, has_preds):
    """Pallas equivalent of pred_metrics(preds, gt_preds, has_preds)."""
    # Mirror `assert has_preds.all()` only for host numpy data (the PostProcess
    # flow) -- never force a device->host sync / pipeline flush.
    if isinstance(has_preds, np.ndarray):
        assert has_preds.all()
    # TODO(synk): add a masked-error path if has_preds can ever contain False.
    return _pred_metrics_device(jnp.asarray(preds), jnp.asarray(gt_preds))


# ----------------------------------------------------------------------------
# PostProcess module (JAX version) -- forward is pure glue (slicing)
# ----------------------------------------------------------------------------
class PostProcess:
    def __init__(self, config=None):
        self.config = config

    def forward(self, out, data):
        post_out = dict()
        post_out["preds"] = [np.asarray(x[0:1]) for x in out["reg"]]
        post_out["gt_preds"] = [np.asarray(x[0:1]) for x in data["gt_preds"]]
        post_out["loc_preds"] = [np.asarray(x[0:1]) for x in data["loc_preds"]]
        post_out["has_preds"] = [np.asarray(x[0:1]) for x in data["has_preds"]]
        return post_out

    __call__ = forward


# ----------------------------------------------------------------------------
# numpy reference (verbatim semantics of the original pred_metrics)
# ----------------------------------------------------------------------------
def pred_metrics_np(preds, gt_preds, has_preds):
    assert has_preds.all()
    preds = np.asarray(preds, np.float32)
    gt_preds = np.asarray(gt_preds, np.float32)
    err = np.sqrt(((preds - np.expand_dims(gt_preds, 1)) ** 2).sum(3))
    ade1 = err[:, 0].mean()
    fde1 = err[:, 0, -1].mean()
    min_idcs = err[:, :, -1].argmin(1)
    row_idcs = np.arange(len(min_idcs)).astype(np.int64)
    err = err[row_idcs, min_idcs]
    ade = err.mean()
    fde = err[:, -1].mean()
    return ade1, fde1, ade, fde, min_idcs


if __name__ == "__main__":
    key = jax.random.PRNGKey(0)
    num_samples = 2      # batch elements (one agent kept per sample via [0:1])
    num_actors = 3       # actors per sample (only actor 0 survives the slice)
    num_mods = 6
    num_preds = 30

    # Build synthetic model output / data dicts (lists of per-sample arrays).
    keys = jax.random.split(key, 3 * num_samples)
    out = {"reg": []}
    data = {"gt_preds": [], "loc_preds": [], "has_preds": []}
    for s in range(num_samples):
        reg = jax.random.normal(keys[3 * s],
                                (num_actors, num_mods, num_preds, 2), jnp.float32)
        gt = jax.random.normal(keys[3 * s + 1],
                               (num_actors, num_preds, 2), jnp.float32)
        loc = jax.random.normal(keys[3 * s + 2],
                                (num_actors, num_preds, 2), jnp.float32)
        has = jnp.ones((num_actors, num_preds), dtype=bool)
        out["reg"].append(np.asarray(reg))
        data["gt_preds"].append(np.asarray(gt))
        data["loc_preds"].append(np.asarray(loc))
        data["has_preds"].append(np.asarray(has))

    post_process = PostProcess(config={})
    post_out = post_process(out, data)

    preds = np.concatenate(post_out["preds"], 0)          # (2, 6, 30, 2)
    gt_preds = np.concatenate(post_out["gt_preds"], 0)    # (2, 30, 2)
    has_preds = np.concatenate(post_out["has_preds"], 0)  # (2, 30)

    ade1, fde1, ade, fde, min_idcs = pred_metrics_pallas(preds, gt_preds, has_preds)
    results = jax.block_until_ready((ade1, fde1, ade, fde, min_idcs))

    # Verify against the verbatim numpy reference.
    r_ade1, r_fde1, r_ade, r_fde, r_idcs = pred_metrics_np(preds, gt_preds, has_preds)
    np.testing.assert_allclose(np.asarray(results[0]), r_ade1, rtol=1e-5, atol=1e-5)
    np.testing.assert_allclose(np.asarray(results[1]), r_fde1, rtol=1e-5, atol=1e-5)
    np.testing.assert_allclose(np.asarray(results[2]), r_ade, rtol=1e-5, atol=1e-5)
    np.testing.assert_allclose(np.asarray(results[3]), r_fde, rtol=1e-5, atol=1e-5)
    np.testing.assert_array_equal(np.asarray(results[4]), r_idcs)

    print("KERNEL_OK")
</pallas_src>

<mosaic_0001>
module attributes {stable_mosaic.version = 11 : i64} {
  func.func @_pred_metrics_kernel(%arg0: i32, %arg1: memref<2x6x30x128xf32, #tpu.memory_space<vmem>>, %arg2: memref<2x30x128xf32, #tpu.memory_space<vmem>>, %arg3: memref<4x128xf32, #tpu.memory_space<vmem>>, %arg4: memref<1x128xi32, #tpu.memory_space<vmem>>) attributes {dimension_semantics = [#tpu.dimension_semantics<parallel>], iteration_bounds = array<i64: 1>, scalar_prefetch = 0 : i64, scratch_operands = 0 : i64, tpu.core_type = #tpu.core_type<tc>, window_params = [{transform_indices = @transform_0, window_bounds = array<i64: 2, 6, 30, 128>}, {transform_indices = @transform_1, window_bounds = array<i64: 2, 30, 128>}, {transform_indices = @transform_2, window_bounds = array<i64: 4, 128>}, {transform_indices = @transform_3, window_bounds = array<i64: 1, 128>}]} {
    %c0 = arith.constant 0 : index
    %c0_0 = arith.constant 0 : index
    %c0_1 = arith.constant 0 : index
    %0 = vector.load %arg2[%c0, %c0_0, %c0_1] : memref<2x30x128xf32, #tpu.memory_space<vmem>>, vector<1x30x128xf32>
    %1 = vector.shape_cast %0 : vector<1x30x128xf32> to vector<30x128xf32>
    %c1 = arith.constant 1 : index
    %c0_2 = arith.constant 0 : index
    %c0_3 = arith.constant 0 : index
    %2 = vector.load %arg2[%c1, %c0_2, %c0_3] : memref<2x30x128xf32, #tpu.memory_space<vmem>>, vector<1x30x128xf32>
    %3 = vector.shape_cast %2 : vector<1x30x128xf32> to vector<30x128xf32>
    %c0_4 = arith.constant 0 : index
    %c0_5 = arith.constant 0 : index
    %c0_6 = arith.constant 0 : index
    %c0_7 = arith.constant 0 : index
    %4 = vector.load %arg1[%c0_4, %c0_5, %c0_6, %c0_7] : memref<2x6x30x128xf32, #tpu.memory_space<vmem>>, vector<1x1x30x128xf32>
    %5 = vector.shape_cast %4 : vector<1x1x30x128xf32> to vector<30x128xf32>
    %6 = arith.subf %5, %1 : vector<30x128xf32>
    %c1_8 = arith.constant 1 : index
    %c0_9 = arith.constant 0 : index
    %c0_10 = arith.constant 0 : index
    %c0_11 = arith.constant 0 : index
    %7 = vector.load %arg1[%c1_8, %c0_9, %c0_10, %c0_11] : memref<2x6x30x128xf32, #tpu.memory_space<vmem>>, vector<1x1x30x128xf32>
    %8 = vector.shape_cast %7 : vector<1x1x30x128xf32> to vector<30x128xf32>
    %9 = arith.subf %8, %3 : vector<30x128xf32>
    %10 = arith.mulf %6, %6 : vector<30x128xf32>
    %11 = arith.mulf %9, %9 : vector<30x128xf32>
    %12 = arith.addf %10, %11 : vector<30x128xf32>
    %13 = vector.extract_strided_slice %12 {offsets = [29, 0], sizes = [1, 128], strides = [1, 1]} : vector<30x128xf32> to vector<1x128xf32>
    %14 = math.sqrt %13 : vector<1x128xf32>
    %c0_i32 = arith.constant 0 : i32
    %15 = vector.broadcast %c0_i32 : i32 to vector<1x128xi32>
    %c0_12 = arith.constant 0 : index
    %c1_13 = arith.constant 1 : index
    %c0_14 = arith.constant 0 : index
    %c0_15 = arith.constant 0 : index
    %16 = vector.load %arg1[%c0_12, %c1_13, %c0_14, %c0_15] : memref<2x6x30x128xf32, #tpu.memory_space<vmem>>, vector<1x1x30x128xf32>
    %17 = vector.shape_cast %16 : vector<1x1x30x128xf32> to vector<30x128xf32>
    %18 = arith.subf %17, %1 : vector<30x128xf32>
    %c1_16 = arith.constant 1 : index
    %c1_17 = arith.constant 1 : index
    %c0_18 = arith.constant 0 : index
    %c0_19 = arith.constant 0 : index
    %19 = vector.load %arg1[%c1_16, %c1_17, %c0_18, %c0_19] : memref<2x6x30x128xf32, #tpu.memory_space<vmem>>, vector<1x1x30x128xf32>
    %20 = vector.shape_cast %19 : vector<1x1x30x128xf32> to vector<30x128xf32>
    %21 = arith.subf %20, %3 : vector<30x128xf32>
    %22 = arith.mulf %18, %18 : vector<30x128xf32>
    %23 = arith.mulf %21, %21 : vector<30x128xf32>
    %24 = arith.addf %22, %23 : vector<30x128xf32>
    %25 = vector.extract_strided_slice %24 {offsets = [29, 0], sizes = [1, 128], strides = [1, 1]} : vector<30x128xf32> to vector<1x128xf32>
    %26 = math.sqrt %25 : vector<1x128xf32>
    %27 = arith.cmpf olt, %26, %14 : vector<1x128xf32>
    %28 = arith.select %27, %26, %14 : vector<1x128xi1>, vector<1x128xf32>
    %c1_i32 = arith.constant 1 : i32
    %29 = vector.broadcast %c1_i32 : i32 to vector<1x128xi32>
    %30 = arith.select %27, %29, %15 : vector<1x128xi1>, vector<1x128xi32>
    %31 = vector.shape_cast %27 : vector<1x128xi1> to vector<1x128xi1>
    %32 = vector.broadcast %31 : vector<1x128xi1> to vector<30x128xi1>
    %33 = arith.select %32, %24, %12 : vector<30x128xi1>, vector<30x128xf32>
    %c0_20 = arith.constant 0 : index
    %c2 = arith.constant 2 : index
    %c0_21 = arith.constant 0 : index
    %c0_22 = arith.constant 0 : index
    %34 = vector.load %arg1[%c0_20, %c2, %c0_21, %c0_22] : memref<2x6x30x128xf32, #tpu.memory_space<vmem>>, vector<1x1x30x128xf32>
    %35 = vector.shape_cast %34 : vector<1x1x30x128xf32> to vector<30x128xf32>
    %36 = arith.subf %35, %1 : vector<30x128xf32>
    %c1_23 = arith.constant 1 : index
    %c2_24 = arith.constant 2 : index
    %c0_25 = arith.constant 0 : index
    %c0_26 = arith.constant 0 : index
    %37 = vector.load %arg1[%c1_23, %c2_24, %c0_25, %c0_26] : memref<2x6x30x128xf32, #tpu.memory_space<vmem>>, vector<1x1x30x128xf32>
    %38 = vector.shape_cast %37 : vector<1x1x30x128xf32> to vector<30x128xf32>
    %39 = arith.subf %38, %3 : vector<30x128xf32>
    %40 = arith.mulf %36, %36 : vector<30x128xf32>
    %41 = arith.mulf %39, %39 : vector<30x128xf32>
    %42 = arith.addf %40, %41 : vector<30x128xf32>
    %43 = vector.extract_strided_slice %42 {offsets = [29, 0], sizes = [1, 128], strides = [1, 1]} : vector<30x128xf32> to vector<1x128xf32>
    %44 = math.sqrt %43 : vector<1x128xf32>
    %45 = arith.cmpf olt, %44, %28 : vector<1x128xf32>
    %46 = arith.select %45, %44, %28 : vector<1x128xi1>, vector<1x128xf32>
    %c2_i32 = arith.constant 2 : i32
    %47 = vector.broadcast %c2_i32 : i32 to vector<1x128xi32>
    %48 = arith.select %45, %47, %30 : vector<1x128xi1>, vector<1x128xi32>
    %49 = vector.shape_cast %45 : vector<1x128xi1> to vector<1x128xi1>
    %50 = vector.broadcast %49 : vector<1x128xi1> to vector<30x128xi1>
    %51 = arith.select %50, %42, %33 : vector<30x128xi1>, vector<30x128xf32>
    %c0_27 = arith.constant 0 : index
    %c3 = arith.constant 3 : index
    %c0_28 = arith.constant 0 : index
    %c0_29 = arith.constant 0 : index
    %52 = vector.load %arg1[%c0_27, %c3, %c0_28, %c0_29] : memref<2x6x30x128xf32, #tpu.memory_space<vmem>>, vector<1x1x30x128xf32>
    %53 = vector.shape_cast %52 : vector<1x1x30x128xf32> to vector<30x128xf32>
    %54 = arith.subf %53, %1 : vector<30x128xf32>
    %c1_30 = arith.constant 1 : index
    %c3_31 = arith.constant 3 : index
    %c0_32 = arith.constant 0 : index
    %c0_33 = arith.constant 0 : index
    %55 = vector.load %arg1[%c1_30, %c3_31, %c0_32, %c0_33] : memref<2x6x30x128xf32, #tpu.memory_space<vmem>>, vector<1x1x30x128xf32>
    %56 = vector.shape_cast %55 : vector<1x1x30x128xf32> to vector<30x128xf32>
    %57 = arith.subf %56, %3 : vector<30x128xf32>
    %58 = arith.mulf %54, %54 : vector<30x128xf32>
    %59 = arith.mulf %57, %57 : vector<30x128xf32>
    %60 = arith.addf %58, %59 : vector<30x128xf32>
    %61 = vector.extract_strided_slice %60 {offsets = [29, 0], sizes = [1, 128], strides = [1, 1]} : vector<30x128xf32> to vector<1x128xf32>
    %62 = math.sqrt %61 : vector<1x128xf32>
    %63 = arith.cmpf olt, %62, %46 : vector<1x128xf32>
    %64 = arith.select %63, %62, %46 : vector<1x128xi1>, vector<1x128xf32>
    %c3_i32 = arith.constant 3 : i32
    %65 = vector.broadcast %c3_i32 : i32 to vector<1x128xi32>
    %66 = arith.select %63, %65, %48 : vector<1x128xi1>, vector<1x128xi32>
    %67 = vector.shape_cast %63 : vector<1x128xi1> to vector<1x128xi1>
    %68 = vector.broadcast %67 : vector<1x128xi1> to vector<30x128xi1>
    %69 = arith.select %68, %60, %51 : vector<30x128xi1>, vector<30x128xf32>
    %c0_34 = arith.constant 0 : index
    %c4 = arith.constant 4 : index
    %c0_35 = arith.constant 0 : index
    %c0_36 = arith.constant 0 : index
    %70 = vector.load %arg1[%c0_34, %c4, %c0_35, %c0_36] : memref<2x6x30x128xf32, #tpu.memory_space<vmem>>, vector<1x1x30x128xf32>
    %71 = vector.shape_cast %70 : vector<1x1x30x128xf32> to vector<30x128xf32>
    %72 = arith.subf %71, %1 : vector<30x128xf32>
    %c1_37 = arith.constant 1 : index
    %c4_38 = arith.constant 4 : index
    %c0_39 = arith.constant 0 : index
    %c0_40 = arith.constant 0 : index
    %73 = vector.load %arg1[%c1_37, %c4_38, %c0_39, %c0_40] : memref<2x6x30x128xf32, #tpu.memory_space<vmem>>, vector<1x1x30x128xf32>
    %74 = vector.shape_cast %73 : vector<1x1x30x128xf32> to vector<30x128xf32>
    %75 = arith.subf %74, %3 : vector<30x128xf32>
    %76 = arith.mulf %72, %72 : vector<30x128xf32>
    %77 = arith.mulf %75, %75 : vector<30x128xf32>
    %78 = arith.addf %76, %77 : vector<30x128xf32>
    %79 = vector.extract_strided_slice %78 {offsets = [29, 0], sizes = [1, 128], strides = [1, 1]} : vector<30x128xf32> to vector<1x128xf32>
    %80 = math.sqrt %79 : vector<1x128xf32>
    %81 = arith.cmpf olt, %80, %64 : vector<1x128xf32>
    %82 = arith.select %81, %80, %64 : vector<1x128xi1>, vector<1x128xf32>
    %c4_i32 = arith.constant 4 : i32
    %83 = vector.broadcast %c4_i32 : i32 to vector<1x128xi32>
    %84 = arith.select %81, %83, %66 : vector<1x128xi1>, vector<1x128xi32>
    %85 = vector.shape_cast %81 : vector<1x128xi1> to vector<1x128xi1>
    %86 = vector.broadcast %85 : vector<1x128xi1> to vector<30x128xi1>
    %87 = arith.select %86, %78, %69 : vector<30x128xi1>, vector<30x128xf32>
    %c0_41 = arith.constant 0 : index
    %c5 = arith.constant 5 : index
    %c0_42 = arith.constant 0 : index
    %c0_43 = arith.constant 0 : index
    %88 = vector.load %arg1[%c0_41, %c5, %c0_42, %c0_43] : memref<2x6x30x128xf32, #tpu.memory_space<vmem>>, vector<1x1x30x128xf32>
    %89 = vector.shape_cast %88 : vector<1x1x30x128xf32> to vector<30x128xf32>
    %90 = arith.subf %89, %1 : vector<30x128xf32>
    %c1_44 = arith.constant 1 : index
    %c5_45 = arith.constant 5 : index
    %c0_46 = arith.constant 0 : index
    %c0_47 = arith.constant 0 : index
    %91 = vector.load %arg1[%c1_44, %c5_45, %c0_46, %c0_47] : memref<2x6x30x128xf32, #tpu.memory_space<vmem>>, vector<1x1x30x128xf32>
    %92 = vector.shape_cast %91 : vector<1x1x30x128xf32> to vector<30x128xf32>
    %93 = arith.subf %92, %3 : vector<30x128xf32>
    %94 = arith.mulf %90, %90 : vector<30x128xf32>
    %95 = arith.mulf %93, %93 : vector<30x128xf32>
    %96 = arith.addf %94, %95 : vector<30x128xf32>
    %97 = vector.extract_strided_slice %96 {offsets = [29, 0], sizes = [1, 128], strides = [1, 1]} : vector<30x128xf32> to vector<1x128xf32>
    %98 = math.sqrt %97 : vector<1x128xf32>
    %99 = arith.cmpf olt, %98, %82 : vector<1x128xf32>
    %c5_i32 = arith.constant 5 : i32
    %100 = vector.broadcast %c5_i32 : i32 to vector<1x128xi32>
    %101 = arith.select %99, %100, %84 : vector<1x128xi1>, vector<1x128xi32>
    %102 = vector.shape_cast %99 : vector<1x128xi1> to vector<1x128xi1>
    %103 = vector.broadcast %102 : vector<1x128xi1> to vector<30x128xi1>
    %104 = arith.select %103, %96, %87 : vector<30x128xi1>, vector<30x128xf32>
    %105 = math.sqrt %12 : vector<30x128xf32>
    %106 = math.sqrt %104 : vector<30x128xf32>
    %cst = arith.constant dense<0.000000e+00> : vector<128xf32>
    %107 = vector.multi_reduction <add>, %105, %cst [0] : vector<30x128xf32> to vector<128xf32>
    %108 = vector.shape_cast %107 : vector<128xf32> to vector<1x128xf32>
    %c0_48 = arith.constant 0 : index
    %c0_49 = arith.constant 0 : index
    %109 = vector.load %arg3[%c0_48, %c0_49] : memref<4x128xf32, #tpu.memory_space<vmem>>, vector<1x128xf32>
    tpu.vector_store %arg3[%c0_48, %c0_49], %108 {strides = array<i32>} : memref<4x128xf32, #tpu.memory_space<vmem>>, vector<1x128xf32>,
    %110 = vector.extract_strided_slice %105 {offsets = [29, 0], sizes = [1, 128], strides = [1, 1]} : vector<30x128xf32> to vector<1x128xf32>
    %c1_50 = arith.constant 1 : index
    %c0_51 = arith.constant 0 : index
    %111 = vector.load %arg3[%c1_50, %c0_51] : memref<4x128xf32, #tpu.memory_space<vmem>>, vector<1x128xf32>
    tpu.vector_store %arg3[%c1_50, %c0_51], %110 {strides = array<i32>} : memref<4x128xf32, #tpu.memory_space<vmem>>, vector<1x128xf32>,
    %cst_52 = arith.constant dense<0.000000e+00> : vector<128xf32>
    %112 = vector.multi_reduction <add>, %106, %cst_52 [0] : vector<30x128xf32> to vector<128xf32>
    %113 = vector.shape_cast %112 : vector<128xf32> to vector<1x128xf32>
    %c2_53 = arith.constant 2 : index
    %c0_54 = arith.constant 0 : index
    %114 = vector.load %arg3[%c2_53, %c0_54] : memref<4x128xf32, #tpu.memory_space<vmem>>, vector<1x128xf32>
    tpu.vector_store %arg3[%c2_53, %c0_54], %113 {strides = array<i32>} : memref<4x128xf32, #tpu.memory_space<vmem>>, vector<1x128xf32>,
    %115 = vector.extract_strided_slice %106 {offsets = [29, 0], sizes = [1, 128], strides = [1, 1]} : vector<30x128xf32> to vector<1x128xf32>
    %c3_55 = arith.constant 3 : index
    %c0_56 = arith.constant 0 : index
    %116 = vector.load %arg3[%c3_55, %c0_56] : memref<4x128xf32, #tpu.memory_space<vmem>>, vector<1x128xf32>
    tpu.vector_store %arg3[%c3_55, %c0_56], %115 {strides = array<i32>} : memref<4x128xf32, #tpu.memory_space<vmem>>, vector<1x128xf32>,
    %c0_57 = arith.constant 0 : index
    %c0_58 = arith.constant 0 : index
    %117 = vector.load %arg4[%c0_57, %c0_58] : memref<1x128xi32, #tpu.memory_space<vmem>>, vector<1x128xi32>
    tpu.vector_store %arg4[%c0_57, %c0_58], %101 {strides = array<i32>} : memref<1x128xi32, #tpu.memory_space<vmem>>, vector<1x128xi32>,
    return
  }
  func.func @transform_0(%arg0: i32) -> (i32, i32, i32, i32) {
    %c0_i32 = arith.constant 0 : i32
    %c0_i32_0 = arith.constant 0 : i32
    %c0_i32_1 = arith.constant 0 : i32
    %c0_i32_2 = arith.constant 0 : i32
    return %c0_i32, %c0_i32_0, %c0_i32_1, %arg0 : i32, i32, i32, i32
  }
  func.func @transform_1(%arg0: i32) -> (i32, i32, i32) {
    %c0_i32 = arith.constant 0 : i32
    %c0_i32_0 = arith.constant 0 : i32
    %c0_i32_1 = arith.constant 0 : i32
    return %c0_i32, %c0_i32_0, %arg0 : i32, i32, i32
  }
  func.func @transform_2(%arg0: i32) -> (i32, i32) {
    %c0_i32 = arith.constant 0 : i32
    %c0_i32_0 = arith.constant 0 : i32
    return %c0_i32, %arg0 : i32, i32
  }
  func.func @transform_3(%arg0: i32) -> (i32, i32) {
    %c0_i32 = arith.constant 0 : i32
    %c0_i32_0 = arith.constant 0 : i32
    return %c0_i32, %arg0 : i32, i32
  }
}

</mosaic_0001>

<llo_original>
// kernel: _pred_metrics_device.1
$region0: #{_pred_metrics_device.1}
  #allocation0 [shape = 'u32[]', space=smem, size = 0x4, offset = 0x4, fixed_abs, tag = 'smem constant byte address 0x4 - core index']
  #allocation1 [shape = 'u32[144,128]{1,0:T(1,128)}', space=vmem, size = 0x12000, scoped, tag = 'internal scratch']
  %s0 = inlined_call_operand.vmem [shape: f32[2,6,30,128], index: 0, kind: input, shape index: {}]
  %s1 = inlined_call_operand.vmem [shape: f32[2,30,128], index: 1, kind: input, shape index: {}]
  %s2 = inlined_call_operand.vmem [shape: f32[4,128], index: 2, kind: output, shape index: {0}]
  %s3 = inlined_call_operand.vmem [shape: s32[1,128], index: 3, kind: output, shape index: {1}]
  %4 = xla_tuple %s2, %s3
  %s5 = sld [smem:[#allocation0]]
  $region26: #{_pred_metrics_device.1} parent=0
    _
  %s7 = ssub.s32 1, %s5
  %s8 = scalar_select 0, %s7, %s5
  // Predicated region
  $region2: #{_pred_metrics_device.1} parent=0 // pred_check
    _
  $region3: #{_pred_metrics_device.1} parent=0 // pred_check_branch
    %10 = sbr.rel (0) target = $region5
  $region4: #{_pred_metrics_device.1} parent=0 // pred_region
    _
  $region5: #{_pred_metrics_device.1} parent=0 // pred_fallthru
    _
  // Predicated region
  $region6: #{_pred_metrics_device.1} parent=0 // pred_check
    _
  $region7: #{_pred_metrics_device.1} parent=0 // pred_check_branch
    %12 = sbr.rel (0) target = $region9
  $region8: #{_pred_metrics_device.1} parent=0 // pred_region
    _
  $region9: #{_pred_metrics_device.1} parent=0 // pred_fallthru
    _
  %v13 = vld [vmem:[%s1] sm:$0xff]
  %v14 = vld [vmem:[%s1 + $0x8] sm:$0xff]
  %v15 = vld [vmem:[%s1 + $0x10] sm:$0xff]
  %v16 = vld [vmem:[%s1 + $0x18] sm:$0x3f]
  %s17 = scalar_lea.vmem %s1, 32
  %v18 = vld [vmem:[%s17] sm:$0xff]
  %v19 = vld [vmem:[%s17 + $0x8] sm:$0xff]
  %v20 = vld [vmem:[%s17 + $0x10] sm:$0xff]
  %v21 = vld [vmem:[%s17 + $0x18] sm:$0x3f]
  %v22 = vld [vmem:[%s0] sm:$0xff]
  %v23 = vld [vmem:[%s0 + $0x8] sm:$0xff]
  %v24 = vld [vmem:[%s0 + $0x10] sm:$0xff]
  %v25 = vld [vmem:[%s0 + $0x18] sm:$0x3f]
  %v26 = vsub.f32 %v22, %v13
  %v27 = vsub.f32 %v23, %v14
  %v28 = vsub.f32 %v24, %v15
  %v29 = vsub.f32 %v25, %v16
  %s30 = scalar_lea.vmem %s0, 192
  %v31 = vld [vmem:[%s30] sm:$0xff]
  %v32 = vld [vmem:[%s30 + $0x8] sm:$0xff]
  %v33 = vld [vmem:[%s30 + $0x10] sm:$0xff]
  %v34 = vld [vmem:[%s30 + $0x18] sm:$0x3f]
  %v35 = vsub.f32 %v31, %v18
  %v36 = vsub.f32 %v32, %v19
  %v37 = vsub.f32 %v33, %v20
  %v38 = vsub.f32 %v34, %v21
  %v39 = vmul.f32 %v26, %v26
  %v40 = vmul.f32 %v27, %v27
  %v41 = vmul.f32 %v28, %v28
  %v42 = vmul.f32 %v29, %v29
  %v43 = vmul.f32 %v35, %v35
  %v44 = vmul.f32 %v36, %v36
  %v45 = vmul.f32 %v37, %v37
  %v46 = vmul.f32 %v38, %v38
  %v47 = vadd.f32 %v39, %v43
  %v48 = vadd.f32 %v40, %v44
  %v49 = vadd.f32 %v41, %v45
  %v50 = vadd.f32 %v42, %v46
  %v51 = vrsqrt.pop %v50
  %v52 = vmul.f32 %v50, %v51
  %vm53 = vcmp.eq.f32.partialorder %v50, inf
  %v54 = vsel %vm53, %v50, %v52
  %vm55 = vcmp.eq.f32.partialorder %v50, 0.0
  %v56 = vand.u32 %v50, 2147483648
  %v57 = vsel %vm55, %v56, %v54
  %s58 = scalar_lea.vmem %s0, 32
  %v59 = vld [vmem:[%s58] sm:$0xff]
  %v60 = vld [vmem:[%s58 + $0x8] sm:$0xff]
  %v61 = vld [vmem:[%s58 + $0x10] sm:$0xff]
  %v62 = vld [vmem:[%s58 + $0x18] sm:$0x3f]
  %v63 = vsub.f32 %v59, %v13
  %v64 = vsub.f32 %v60, %v14
  %v65 = vsub.f32 %v61, %v15
  %v66 = vsub.f32 %v62, %v16
  %s67 = scalar_lea.vmem %s0, 224
  %v68 = vld [vmem:[%s67] sm:$0xff]
  %v69 = vld [vmem:[%s67 + $0x8] sm:$0xff]
  %v70 = vld [vmem:[%s67 + $0x10] sm:$0xff]
  %v71 = vld [vmem:[%s67 + $0x18] sm:$0x3f]
  %v72 = vsub.f32 %v68, %v18
  %v73 = vsub.f32 %v69, %v19
  %v74 = vsub.f32 %v70, %v20
  %v75 = vsub.f32 %v71, %v21
  %v76 = vmul.f32 %v63, %v63
  %v77 = vmul.f32 %v64, %v64
  %v78 = vmul.f32 %v65, %v65
  %v79 = vmul.f32 %v66, %v66
  %v80 = vmul.f32 %v72, %v72
  %v81 = vmul.f32 %v73, %v73
  %v82 = vmul.f32 %v74, %v74
  %v83 = vmul.f32 %v75, %v75
  %v84 = vadd.f32 %v76, %v80
  %v85 = vadd.f32 %v77, %v81
  %v86 = vadd.f32 %v78, %v82
  %v87 = vadd.f32 %v79, %v83
  %v88 = vrsqrt.pop %v87
  %v89 = vmul.f32 %v87, %v88
  %vm90 = vcmp.eq.f32.partialorder %v87, inf
  %v91 = vsel %vm90, %v87, %v89
  %vm92 = vcmp.eq.f32.partialorder %v87, 0.0
  %v93 = vand.u32 %v87, 2147483648
  %v94 = vsel %vm92, %v93, %v91
  %vm95 = vcmp.lt.f32.partialorder %v94, %v57
  %v96 = vsel %vm95, %v94, %v57
  %v97 = vsel %vm95, 1, 0
  %v98 = vlaneseq
  %v99 = vshrl.u32 %v98, 7
  %v100 = vsub.s32 5, %v99
  %v101 = vrot.slane %v97, %v100
  %vm102 = vcmp.eq.s32.totalorder %v101, 1
  %v103 = vsel %vm102, %v84, %v47
  %v104 = vsel %vm102, %v85, %v48
  %v105 = vsel %vm102, %v86, %v49
  %v106 = vsel %vm102, %v87, %v50
  %s107 = scalar_lea.vmem %s0, 64
  %v108 = vld [vmem:[%s107] sm:$0xff]
  %v109 = vld [vmem:[%s107 + $0x8] sm:$0xff]
  %v110 = vld [vmem:[%s107 + $0x10] sm:$0xff]
  %v111 = vld [vmem:[%s107 + $0x18] sm:$0x3f]
  %v112 = vsub.f32 %v108, %v13
  %v113 = vsub.f32 %v109, %v14
  %v114 = vsub.f32 %v110, %v15
  %v115 = vsub.f32 %v111, %v16
  %s116 = scalar_lea.vmem %s0, 256
  %v117 = vld [vmem:[%s116] sm:$0xff]
  %v118 = vld [vmem:[%s116 + $0x8] sm:$0xff]
  %v119 = vld [vmem:[%s116 + $0x10] sm:$0xff]
  %v120 = vld [vmem:[%s116 + $0x18] sm:$0x3f]
  %v121 = vsub.f32 %v117, %v18
  %v122 = vsub.f32 %v118, %v19
  %v123 = vsub.f32 %v119, %v20
  %v124 = vsub.f32 %v120, %v21
  %v125 = vmul.f32 %v112, %v112
  %v126 = vmul.f32 %v113, %v113
  %v127 = vmul.f32 %v114, %v114
  %v128 = vmul.f32 %v115, %v115
  %v129 = vmul.f32 %v121, %v121
  %v130 = vmul.f32 %v122, %v122
  %v131 = vmul.f32 %v123, %v123
  %v132 = vmul.f32 %v124, %v124
  %v133 = vadd.f32 %v125, %v129
  %v134 = vadd.f32 %v126, %v130
  %v135 = vadd.f32 %v127, %v131
  %v136 = vadd.f32 %v128, %v132
  %v137 = vrsqrt.pop %v136
  %v138 = vmul.f32 %v136, %v137
  %vm139 = vcmp.eq.f32.partialorder %v136, inf
  %v140 = vsel %vm139, %v136, %v138
  %vm141 = vcmp.eq.f32.partialorder %v136, 0.0
  %v142 = vand.u32 %v136, 2147483648
  %v143 = vsel %vm141, %v142, %v140
  %vm144 = vcmp.lt.f32.partialorder %v143, %v96
  %v145 = vsel %vm144, %v143, %v96
  %v146 = vsel %vm144, 2, %v97
  %v147 = vsel %vm144, 1, 0
  %v148 = vlaneseq
  %v149 = vshrl.u32 %v148, 7
  %v150 = vsub.s32 5, %v149
  %v151 = vrot.slane %v147, %v150
  %vm152 = vcmp.eq.s32.totalorder %v151, 1
  %v153 = vsel %vm152, %v133, %v103
  %v154 = vsel %vm152, %v134, %v104
  %v155 = vsel %vm152, %v135, %v105
  %v156 = vsel %vm152, %v136, %v106
  %s157 = scalar_lea.vmem %s0, 96
  %v158 = vld [vmem:[%s157] sm:$0xff]
  %v159 = vld [vmem:[%s157 + $0x8] sm:$0xff]
  %v160 = vld [vmem:[%s157 + $0x10] sm:$0xff]
  %v161 = vld [vmem:[%s157 + $0x18] sm:$0x3f]
  %v162 = vsub.f32 %v158, %v13
  %v163 = vsub.f32 %v159, %v14
  %v164 = vsub.f32 %v160, %v15
  %v165 = vsub.f32 %v161, %v16
  %s166 = scalar_lea.vmem %s0, 288
  %v167 = vld [vmem:[%s166] sm:$0xff]
  %v168 = vld [vmem:[%s166 + $0x8] sm:$0xff]
  %v169 = vld [vmem:[%s166 + $0x10] sm:$0xff]
  %v170 = vld [vmem:[%s166 + $0x18] sm:$0x3f]
  %v171 = vsub.f32 %v167, %v18
  %v172 = vsub.f32 %v168, %v19
  %v173 = vsub.f32 %v169, %v20
  %v174 = vsub.f32 %v170, %v21
  %v175 = vmul.f32 %v162, %v162
  %v176 = vmul.f32 %v163, %v163
  %v177 = vmul.f32 %v164, %v164
  %v178 = vmul.f32 %v165, %v165
  %v179 = vmul.f32 %v171, %v171
  %v180 = vmul.f32 %v172, %v172
  %v181 = vmul.f32 %v173, %v173
  %v182 = vmul.f32 %v174, %v174
  %v183 = vadd.f32 %v175, %v179
  %v184 = vadd.f32 %v176, %v180
  %v185 = vadd.f32 %v177, %v181
  %v186 = vadd.f32 %v178, %v182
  %v187 = vrsqrt.pop %v186
  %v188 = vmul.f32 %v186, %v187
  %vm189 = vcmp.eq.f32.partialorder %v186, inf
  %v190 = vsel %vm189, %v186, %v188
  %vm191 = vcmp.eq.f32.partialorder %v186, 0.0
  %v192 = vand.u32 %v186, 2147483648
  %v193 = vsel %vm191, %v192, %v190
  %vm194 = vcmp.lt.f32.partialorder %v193, %v145
  %v195 = vsel %vm194, %v193, %v145
  %v196 = vsel %vm194, 3, %v146
  %v197 = vsel %vm194, 1, 0
  %v198 = vlaneseq
  %v199 = vshrl.u32 %v198, 7
  %v200 = vsub.s32 5, %v199
  %v201 = vrot.slane %v197, %v200
  %vm202 = vcmp.eq.s32.totalorder %v201, 1
  %v203 = vsel %vm202, %v183, %v153
  %v204 = vsel %vm202, %v184, %v154
  %v205 = vsel %vm202, %v185, %v155
  %v206 = vsel %vm202, %v186, %v156
  %s207 = scalar_lea.vmem %s0, 128
  %v208 = vld [vmem:[%s207] sm:$0xff]
  %v209 = vld [vmem:[%s207 + $0x8] sm:$0xff]
  %v210 = vld [vmem:[%s207 + $0x10] sm:$0xff]
  %v211 = vld [vmem:[%s207 + $0x18] sm:$0x3f]
  %v212 = vsub.f32 %v208, %v13
  %v213 = vsub.f32 %v209, %v14
  %v214 = vsub.f32 %v210, %v15
  %v215 = vsub.f32 %v211, %v16
  %s216 = scalar_lea.vmem %s0, 320
  %v217 = vld [vmem:[%s216] sm:$0xff]
  %v218 = vld [vmem:[%s216 + $0x8] sm:$0xff]
  %v219 = vld [vmem:[%s216 + $0x10] sm:$0xff]
  %v220 = vld [vmem:[%s216 + $0x18] sm:$0x3f]
  %v221 = vsub.f32 %v217, %v18
  %v222 = vsub.f32 %v218, %v19
  %v223 = vsub.f32 %v219, %v20
  %v224 = vsub.f32 %v220, %v21
  %v225 = vmul.f32 %v212, %v212
  %v226 = vmul.f32 %v213, %v213
  %v227 = vmul.f32 %v214, %v214
  %v228 = vmul.f32 %v215, %v215
  %v229 = vmul.f32 %v221, %v221
  %v230 = vmul.f32 %v222, %v222
  %v231 = vmul.f32 %v223, %v223
  %v232 = vmul.f32 %v224, %v224
  %v233 = vadd.f32 %v225, %v229
  %v234 = vadd.f32 %v226, %v230
  %v235 = vadd.f32 %v227, %v231
  %v236 = vadd.f32 %v228, %v232
  %v237 = vrsqrt.pop %v236
  %v238 = vmul.f32 %v236, %v237
  %vm239 = vcmp.eq.f32.partialorder %v236, inf
  %v240 = vsel %vm239, %v236, %v238
  %vm241 = vcmp.eq.f32.partialorder %v236, 0.0
  %v242 = vand.u32 %v236, 2147483648
  %v243 = vsel %vm241, %v242, %v240
  %vm244 = vcmp.lt.f32.partialorder %v243, %v195
  %v245 = vsel %vm244, %v243, %v195
  %v246 = vsel %vm244, 4, %v196
  %v247 = vsel %vm244, 1, 0
  %v248 = vlaneseq
  %v249 = vshrl.u32 %v248, 7
  %v250 = vsub.s32 5, %v249
  %v251 = vrot.slane %v247, %v250
  %vm252 = vcmp.eq.s32.totalorder %v251, 1
  %v253 = vsel %vm252, %v233, %v203
  %v254 = vsel %vm252, %v234, %v204
  %v255 = vsel %vm252, %v235, %v205
  %v256 = vsel %vm252, %v236, %v206
  %s257 = scalar_lea.vmem %s0, 160
  %v258 = vld [vmem:[%s257] sm:$0xff]
  %v259 = vld [vmem:[%s257 + $0x8] sm:$0xff]
  %v260 = vld [vmem:[%s257 + $0x10] sm:$0xff]
  %v261 = vld [vmem:[%s257 + $0x18] sm:$0x3f]
  %v262 = vsub.f32 %v258, %v13
  %v263 = vsub.f32 %v259, %v14
  %v264 = vsub.f32 %v260, %v15
  %v265 = vsub.f32 %v261, %v16
  %s266 = scalar_lea.vmem %s0, 352
  %v267 = vld [vmem:[%s266] sm:$0xff]
  %v268 = vld [vmem:[%s266 + $0x8] sm:$0xff]
  %v269 = vld [vmem:[%s266 + $0x10] sm:$0xff]
  %v270 = vld [vmem:[%s266 + $0x18] sm:$0x3f]
  %v271 = vsub.f32 %v267, %v18
  %v272 = vsub.f32 %v268, %v19
  %v273 = vsub.f32 %v269, %v20
  %v274 = vsub.f32 %v270, %v21
  %v275 = vmul.f32 %v262, %v262
  %v276 = vmul.f32 %v263, %v263
  %v277 = vmul.f32 %v264, %v264
  %v278 = vmul.f32 %v265, %v265
  %v279 = vmul.f32 %v271, %v271
  %v280 = vmul.f32 %v272, %v272
  %v281 = vmul.f32 %v273, %v273
  %v282 = vmul.f32 %v274, %v274
  %v283 = vadd.f32 %v275, %v279
  %v284 = vadd.f32 %v276, %v280
  %v285 = vadd.f32 %v277, %v281
  %v286 = vadd.f32 %v278, %v282
  %v287 = vrsqrt.pop %v286
  %v288 = vmul.f32 %v286, %v287
  %vm289 = vcmp.eq.f32.partialorder %v286, inf
  %v290 = vsel %vm289, %v286, %v288
  %vm291 = vcmp.eq.f32.partialorder %v286, 0.0
  %v292 = vand.u32 %v286, 2147483648
  %v293 = vsel %vm291, %v292, %v290
  %vm294 = vcmp.lt.f32.partialorder %v293, %v245
  %v295 = vsel %vm294, 5, %v246
  %v296 = vsel %vm294, 1, 0
  %v297 = vlaneseq
  %v298 = vshrl.u32 %v297, 7
  %v299 = vsub.s32 5, %v298
  %v300 = vrot.slane %v296, %v299
  %vm301 = vcmp.eq.s32.totalorder %v300, 1
  %v302 = vsel %vm301, %v283, %v253
  %v303 = vsel %vm301, %v284, %v254
  %v304 = vsel %vm301, %v285, %v255
  %v305 = vsel %vm301, %v286, %v256
  %v306 = vrsqrt.pop %v47
  %v307 = vmul.f32 %v47, %v306
  %vm308 = vcmp.eq.f32.partialorder %v47, inf
  %v309 = vsel %vm308, %v47, %v307
  %vm310 = vcmp.eq.f32.partialorder %v47, 0.0
  %v311 = vand.u32 %v47, 2147483648
  %v312 = vsel %vm310, %v311, %v309
  %v313 = vrsqrt.pop %v48
  %v314 = vmul.f32 %v48, %v313
  %vm315 = vcmp.eq.f32.partialorder %v48, inf
  %v316 = vsel %vm315, %v48, %v314
  %vm317 = vcmp.eq.f32.partialorder %v48, 0.0
  %v318 = vand.u32 %v48, 2147483648
  %v319 = vsel %vm317, %v318, %v316
  %v320 = vrsqrt.pop %v49
  %v321 = vmul.f32 %v49, %v320
  %vm322 = vcmp.eq.f32.partialorder %v49, inf
  %v323 = vsel %vm322, %v49, %v321
  %vm324 = vcmp.eq.f32.partialorder %v49, 0.0
  %v325 = vand.u32 %v49, 2147483648
  %v326 = vsel %vm324, %v325, %v323
  %v327 = vrsqrt.pop %v302
  %v328 = vmul.f32 %v302, %v327
  %vm329 = vcmp.eq.f32.partialorder %v302, inf
  %v330 = vsel %vm329, %v302, %v328
  %vm331 = vcmp.eq.f32.partialorder %v302, 0.0
  %v332 = vand.u32 %v302, 2147483648
  %v333 = vsel %vm331, %v332, %v330
  %v334 = vrsqrt.pop %v303
  %v335 = vmul.f32 %v303, %v334
  %vm336 = vcmp.eq.f32.partialorder %v303, inf
  %v337 = vsel %vm336, %v303, %v335
  %vm338 = vcmp.eq.f32.partialorder %v303, 0.0
  %v339 = vand.u32 %v303, 2147483648
  %v340 = vsel %vm338, %v339, %v337
  %v341 = vrsqrt.pop %v304
  %v342 = vmul.f32 %v304, %v341
  %vm343 = vcmp.eq.f32.partialorder %v304, inf
  %v344 = vsel %vm343, %v304, %v342
  %vm345 = vcmp.eq.f32.partialorder %v304, 0.0
  %v346 = vand.u32 %v304, 2147483648
  %v347 = vsel %vm345, %v346, %v344
  %v348 = vrsqrt.pop %v305
  %v349 = vmul.f32 %v305, %v348
  %vm350 = vcmp.eq.f32.partialorder %v305, inf
  %v351 = vsel %vm350, %v305, %v349
  %vm352 = vcmp.eq.f32.partialorder %v305, 0.0
  %v353 = vand.u32 %v305, 2147483648
  %v354 = vsel %vm352, %v353, %v351
  %v355 = vadd.f32 %v312, %v319
  %v356 = vadd.f32 %v355, %v326
  %vm357 = vcmask 1045504
  %v358 = vsel %vm357, %v57, 0.0
  %v359 = vadd.f32 %v356, %v358
  %v360 = vrot.slane %v359, 4
  %v361 = vadd.f32 %v359, %v360
  %v362 = vrot.slane %v361, 2
  %v363 = vadd.f32 %v361, %v362
  %v364 = vrot.slane %v363, 1
  %v365 = vadd.f32 %v363, %v364
  %366 = vst [vmem:[%s2] sm:$0x1] %v365
  %367 = vst [vmem:[%s2 - $0x4] sm:$0x20] %v57
  %v368 = vadd.f32 %v333, %v340
  %v369 = vadd.f32 %v368, %v347
  %v370 = vsel %vm357, %v354, 0.0
  %v371 = vadd.f32 %v369, %v370
  %v372 = vrot.slane %v371, 4
  %v373 = vadd.f32 %v371, %v372
  %v374 = vrot.slane %v373, 2
  %v375 = vadd.f32 %v373, %v374
  %v376 = vrot.slane %v375, 1
  %v377 = vadd.f32 %v375, %v376
  %378 = vst [vmem:[%s2 + $0x2] sm:$0x1] %v377
  %379 = vst [vmem:[%s2 - $0x2] sm:$0x20] %v354
  %380 = vst [vmem:[%s3 - $0x5] sm:$0x20] %v295
  // Predicated region
  $region10: #{_pred_metrics_device.1} parent=0 // pred_check
    _
  $region11: #{_pred_metrics_device.1} parent=0 // pred_check_branch
    %382 = sbr.rel (0) target = $region13
  $region12: #{_pred_metrics_device.1} parent=0 // pred_region
    _
  $region13: #{_pred_metrics_device.1} parent=0 // pred_fallthru
    _
  // Predicated region
  $region14: #{_pred_metrics_device.1} parent=0 // pred_check
    _
  $region15: #{_pred_metrics_device.1} parent=0 // pred_check_branch
    %384 = sbr.rel (0) target = $region17
  $region16: #{_pred_metrics_device.1} parent=0 // pred_region
    _
  $region17: #{_pred_metrics_device.1} parent=0 // pred_fallthru
    _
  // Predicated region
  $region18: #{_pred_metrics_device.1} parent=0 // pred_check
    _
  $region19: #{_pred_metrics_device.1} parent=0 // pred_check_branch
    %386 = sbr.rel (0) target = $region21
  $region20: #{_pred_metrics_device.1} parent=0 // pred_region
    _
  $region21: #{_pred_metrics_device.1} parent=0 // pred_fallthru
    _
  // Predicated region
  $region22: #{_pred_metrics_device.1} parent=0 // pred_check
    _
  $region23: #{_pred_metrics_device.1} parent=0 // pred_check_branch
    %388 = sbr.rel (0) target = $region25
  $region24: #{_pred_metrics_device.1} parent=0 // pred_region
    _
  $region25: #{_pred_metrics_device.1} parent=0 // pred_fallthru
    _

</llo_original>
